<compile_context>
chip_gen: v7x
topology: tpu7x:2x2x1
jax: 0.10.0
libtpu: 0.0.40
codegen_flags: <defaults>
</compile_context>

<pallas_src>
import functools

import jax
import jax.numpy as jnp
from jax.experimental import pallas as pl
from jax.experimental.pallas import tpu as pltpu


def _textcnn_kernel(ids_ref, emb_ref, w_ref, b_ref, o_ref, *,
                    seq_len, tb, kernel_sizes, n_kernels):
    """Fused TextCNN branch kernel for one block of `tb` sentences.

    ids_ref: (1, tb*S, 1) int32   token ids of this batch block
    emb_ref: (vocab_p, E) f32     embedding table (vocab padded to mult of 8)
    w_ref:   (h_max*E, K_total)   stacked conv weights, zero-padded per branch
    b_ref:   (1, K_total) f32     stacked conv biases
    o_ref:   (1, tb, K_total) f32 pooled features for this block
    """
    S = seq_len
    R = tb * S
    h_max = max(kernel_sizes)
    vocab_p, E = emb_ref.shape
    K_total = w_ref.shape[-1]

    ids = ids_ref[0]                                       # (R, 1) int32

    # ---- Embedding lookup: one-hot @ table (tiny vocab -> MXU, no gather) ----
    v_iota = jax.lax.broadcasted_iota(jnp.int32, (R, vocab_p), 1)
    onehot = (v_iota == ids).astype(jnp.float32)           # (R, vocab_p)
    x = jnp.dot(onehot, emb_ref[...],
                preferred_element_type=jnp.float32)        # (R, E)

    # ---- im2col: row t holds [x[t], x[t+1], ..., x[t+h_max-1]] -------------
    # Zero-pad the tail so every shifted slice has R rows; the rows that pick
    # up padding (or the next sentence when tb > 1) correspond to invalid
    # window starts and are masked out below.
    pad = jnp.zeros((h_max - 1, E), jnp.float32)
    xp = jnp.concatenate([x, pad], axis=0)                 # (R + h_max - 1, E)
    xim = jnp.concatenate([xp[j:j + R, :] for j in range(h_max)],
                          axis=1)                          # (R, h_max*E)

    # ---- All conv branches in one deep matmul, then bias + ReLU -------------
    acc = jnp.dot(xim, w_ref[...],
                  preferred_element_type=jnp.float32)      # (R, K_total)
    acc = jnp.maximum(acc + b_ref[...], 0.0)

    # ---- Mask invalid window starts per branch, then max-over-time ----------
    row = jax.lax.broadcasted_iota(jnp.int32, (R, K_total), 0)
    col = jax.lax.broadcasted_iota(jnp.int32, (R, K_total), 1)
    t = row % S if tb > 1 else row
    lmax = jnp.zeros((R, K_total), jnp.int32)
    for c, h in enumerate(kernel_sizes):
        in_branch = (col >= c * n_kernels) & (col < (c + 1) * n_kernels)
        lmax = jnp.where(in_branch, S - h + 1, lmax)
    # Post-ReLU, every valid activation is >= 0, so masking invalid rows to 0
    # leaves the max-over-time result exactly unchanged.
    acc = jnp.where(t < lmax, acc, 0.0)

    pooled = jnp.max(acc.reshape(tb, S, K_total), axis=1)  # (tb, K_total)
    o_ref[...] = pooled.reshape(1, tb, K_total)


class SentenceEncoderPallas:
    """JAX/Pallas re-implementation of the PyTorch SentenceEncoder forward."""

    def __init__(self, vocab_size, emb_size, n_kernels, kernel_sizes, key):
        self.vocab_size = vocab_size
        self.emb_size = emb_size
        self.n_kernels = n_kernels
        self.kernel_sizes = tuple(kernel_sizes)
        self.h_max = max(self.kernel_sizes)
        self.sent_size = len(self.kernel_sizes) * n_kernels

        keys = jax.random.split(key, 1 + 2 * len(self.kernel_sizes))
        # nn.Embedding(vocab, emb) ~ N(0, 1)
        emb = jax.random.normal(keys[0], (vocab_size, emb_size),
                                dtype=jnp.float32)
        self.emb_table = emb
        # Pad the vocab axis to a multiple of 8 sublanes for the in-kernel
        # one-hot matmul (extra rows are zero and never selected).
        vocab_p = ((vocab_size + 7) // 8) * 8
        self.emb_table_padded = (
            jnp.zeros((vocab_p, emb_size), jnp.float32).at[:vocab_size].set(emb))

        # nn.Conv2d(1, n_kernels, (h, emb_size)): weight (K, 1, h, E), bias (K,)
        self.conv_ws = []   # per-branch (h, E, K), for the pure-JAX reference
        self.conv_bs = []   # per-branch (1, K)
        w_all = jnp.zeros((self.h_max * emb_size, self.sent_size), jnp.float32)
        b_all = jnp.zeros((1, self.sent_size), jnp.float32)
        for c, h in enumerate(self.kernel_sizes):
            fan_in = 1 * h * emb_size
            bound = 1.0 / (fan_in ** 0.5)
            w_torch = jax.random.uniform(
                keys[1 + 2 * c], (n_kernels, 1, h, emb_size),
                minval=-bound, maxval=bound, dtype=jnp.float32)
            b = jax.random.uniform(
                keys[2 + 2 * c], (1, n_kernels),
                minval=-bound, maxval=bound, dtype=jnp.float32)
            w = jnp.transpose(w_torch[:, 0, :, :], (1, 2, 0))   # (h, E, K)
            self.conv_ws.append(w)
            self.conv_bs.append(b)
            # Stack into the fused weight: rows [j*E, (j+1)*E) x cols of branch
            # c hold W_c[j]; offsets j >= h stay zero so the shared im2col
            # buffer (depth h_max*E) works for every branch.
            for j in range(h):
                w_all = w_all.at[j * emb_size:(j + 1) * emb_size,
                                 c * n_kernels:(c + 1) * n_kernels].set(w[j])
            b_all = b_all.at[:, c * n_kernels:(c + 1) * n_kernels].set(b)
        self.w_all = w_all
        self.b_all = b_all

    def forward(self, s, *, tb=1):
        """s: int32 (B, seq_len) word indices -> (B, len(kernel_sizes)*n_kernels).

        tb = sentences per grid step.  The grid over batch is marked
        "parallel" so v7x's 2 TensorCores split it; on v5e/v6e it just enables
        HBM<->VMEM pipelining.  Block VMEM footprint is ~tb*S*(E + h_max*E)*4 B
        plus the (tiny) table/weights, so tb can grow a lot before hitting even
        v5e's 16 MiB scoped limit.
        """
        B, S = s.shape
        assert S >= self.h_max, "seq_len must be >= max(kernel_sizes)"
        assert B % tb == 0, "batch must be divisible by the batch block size"
        nb = B // tb
        ids3 = s.astype(jnp.int32).reshape(nb, tb * S, 1)
        vocab_p, E = self.emb_table_padded.shape
        K_total = self.sent_size

        kernel = functools.partial(
            _textcnn_kernel, seq_len=S, tb=tb,
            kernel_sizes=self.kernel_sizes, n_kernels=self.n_kernels)

        out = pl.pallas_call(
            kernel,
            out_shape=jax.ShapeDtypeStruct((nb, tb, K_total), jnp.float32),
            grid=(nb,),
            in_specs=[
                pl.BlockSpec((1, tb * S, 1), lambda i: (i, 0, 0)),       # ids
                pl.BlockSpec((vocab_p, E), lambda i: (0, 0)),            # table
                pl.BlockSpec((self.h_max * E, K_total), lambda i: (0, 0)),  # W
                pl.BlockSpec((1, K_total), lambda i: (0, 0)),            # bias
            ],
            out_specs=pl.BlockSpec((1, tb, K_total), lambda i: (i, 0, 0)),
            compiler_params=pltpu.CompilerParams(
                dimension_semantics=("parallel",)),
        )(ids3, self.emb_table_padded, self.w_all, self.b_all)
        return out.reshape(B, K_total)

    def forward_reference(self, s):
        """Pure-JAX reference of the same math (for verification)."""
        x = self.emb_table[s]                     # (B, S, E)
        B, S, E = x.shape
        feats = []
        for h, w, b in zip(self.kernel_sizes, self.conv_ws, self.conv_bs):
            L = S - h + 1
            acc = jnp.zeros((B, L, self.n_kernels), jnp.float32)
            for j in range(h):
                acc = acc + jnp.einsum("ble,ek->blk", x[:, j:j + L, :], w[j])
            acc = jnp.maximum(acc + b.reshape(1, 1, -1), 0.0)
            feats.append(jnp.max(acc, axis=1))
        return jnp.concatenate(feats, axis=1)


if __name__ == "__main__":
    vocab_size = 50
    emb_size = 32
    n_kernels = 8
    kernel_sizes = [2, 3, 4]
    batch = 2
    seq_len = 16

    key = jax.random.PRNGKey(0)
    k_params, k_data = jax.random.split(key)

    enc = SentenceEncoderPallas(vocab_size, emb_size, n_kernels, kernel_sizes,
                                key=k_params)

    s = jax.random.randint(k_data, (batch, seq_len), 0, vocab_size,
                           dtype=jnp.int32)

    out = enc.forward(s, tb=1)
    out = jax.block_until_ready(out)

    ref = jax.block_until_ready(enc.forward_reference(s))
    assert out.shape == (batch, len(kernel_sizes) * n_kernels), out.shape
    assert jnp.allclose(out, ref, atol=1e-4, rtol=1e-4), "mismatch vs reference"

    print("KERNEL_OK")
</pallas_src>

<mosaic_0001>
module attributes {stable_mosaic.version = 11 : i64} {
  func.func @_textcnn_kernel(%arg0: i32, %arg1: memref<1x16x1xi32, #tpu.memory_space<vmem>>, %arg2: memref<56x32xf32, #tpu.memory_space<vmem>>, %arg3: memref<128x24xf32, #tpu.memory_space<vmem>>, %arg4: memref<1x24xf32, #tpu.memory_space<vmem>>, %arg5: memref<1x1x24xf32, #tpu.memory_space<vmem>>) attributes {dimension_semantics = [#tpu.dimension_semantics<parallel>], iteration_bounds = array<i64: 2>, scalar_prefetch = 0 : i64, scratch_operands = 0 : i64, tpu.core_type = #tpu.core_type<tc>, window_params = [{transform_indices = @transform_0, window_bounds = array<i64: 1, 16, 1>}, {pipeline_mode = #tpu.pipeline_mode<synchronous>, transform_indices = @transform_1, window_bounds = array<i64: 56, 32>}, {pipeline_mode = #tpu.pipeline_mode<synchronous>, transform_indices = @transform_2, window_bounds = array<i64: 128, 24>}, {pipeline_mode = #tpu.pipeline_mode<synchronous>, transform_indices = @transform_3, window_bounds = array<i64: 1, 24>}, {transform_indices = @transform_4, window_bounds = array<i64: 1, 1, 24>}]} {
    %c0 = arith.constant 0 : index
    %c0_0 = arith.constant 0 : index
    %c0_1 = arith.constant 0 : index
    %0 = vector.load %arg1[%c0, %c0_0, %c0_1] : memref<1x16x1xi32, #tpu.memory_space<vmem>>, vector<1x16x1xi32>
    %1 = vector.shape_cast %0 : vector<1x16x1xi32> to vector<16x1xi32>
    %2 = tpu.iota {dimensions = array<i32: 1>} : vector<16x56xi32>
    %3 = vector.broadcast %1 : vector<16x1xi32> to vector<16x56xi32>
    %4 = arith.cmpi eq, %2, %3 : vector<16x56xi32>
    %5 = arith.extui %4 : vector<16x56xi1> to vector<16x56xi32>
    %6 = arith.sitofp %5 : vector<16x56xi32> to vector<16x56xf32>
    %c0_2 = arith.constant 0 : index
    %c0_3 = arith.constant 0 : index
    %7 = vector.load %arg2[%c0_2, %c0_3] : memref<56x32xf32, #tpu.memory_space<vmem>>, vector<56x32xf32>
    %cst = arith.constant dense<0.000000e+00> : vector<16x32xf32>
    %8 = tpu.matmul %6, %7, %cst {dimension_numbers = #tpu.dot_dimension_numbers<[1], [0], [0], [1], [0, 0, 1, 1], [], []>} : vector<16x56xf32>, vector<56x32xf32>, vector<16x32xf32> -> vector<16x32xf32>
    %cst_4 = arith.constant 0.000000e+00 : f32
    %9 = vector.broadcast %cst_4 : f32 to vector<3x32xf32>
    %10 = tpu.concatenate %8, %9 in 0 : vector<16x32xf32>, vector<3x32xf32> -> vector<19x32xf32>
    %11 = vector.extract_strided_slice %10 {offsets = [0, 0], sizes = [16, 32], strides = [1, 1]} : vector<19x32xf32> to vector<16x32xf32>
    %12 = vector.extract_strided_slice %10 {offsets = [1, 0], sizes = [16, 32], strides = [1, 1]} : vector<19x32xf32> to vector<16x32xf32>
    %13 = vector.extract_strided_slice %10 {offsets = [2, 0], sizes = [16, 32], strides = [1, 1]} : vector<19x32xf32> to vector<16x32xf32>
    %14 = vector.extract_strided_slice %10 {offsets = [3, 0], sizes = [16, 32], strides = [1, 1]} : vector<19x32xf32> to vector<16x32xf32>
    %15 = tpu.concatenate %11, %12, %13, %14 in 1 : vector<16x32xf32>, vector<16x32xf32>, vector<16x32xf32>, vector<16x32xf32> -> vector<16x128xf32>
    %c0_5 = arith.constant 0 : index
    %c0_6 = arith.constant 0 : index
    %16 = vector.load %arg3[%c0_5, %c0_6] : memref<128x24xf32, #tpu.memory_space<vmem>>, vector<128x24xf32>
    %cst_7 = arith.constant dense<0.000000e+00> : vector<16x24xf32>
    %17 = tpu.matmul %15, %16, %cst_7 {dimension_numbers = #tpu.dot_dimension_numbers<[1], [0], [0], [1], [0, 0, 1, 1], [], []>} : vector<16x128xf32>, vector<128x24xf32>, vector<16x24xf32> -> vector<16x24xf32>
    %c0_8 = arith.constant 0 : index
    %c0_9 = arith.constant 0 : index
    %18 = vector.load %arg4[%c0_8, %c0_9] : memref<1x24xf32, #tpu.memory_space<vmem>>, vector<1x24xf32>
    %19 = vector.broadcast %18 : vector<1x24xf32> to vector<16x24xf32>
    %20 = arith.addf %17, %19 : vector<16x24xf32>
    %cst_10 = arith.constant 0.000000e+00 : f32
    %21 = vector.broadcast %cst_10 : f32 to vector<16x24xf32>
    %22 = arith.maximumf %20, %21 : vector<16x24xf32>
    %23 = tpu.iota {dimensions = array<i32: 0>} : vector<16x24xi32>
    %24 = tpu.iota {dimensions = array<i32: 1>} : vector<16x24xi32>
    %c0_i32 = arith.constant 0 : i32
    %25 = vector.broadcast %c0_i32 : i32 to vector<16x24xi32>
    %c0_i32_11 = arith.constant 0 : i32
    %26 = vector.broadcast %c0_i32_11 : i32 to vector<16x24xi32>
    %27 = arith.cmpi sge, %24, %26 : vector<16x24xi32>
    %c8_i32 = arith.constant 8 : i32
    %28 = vector.broadcast %c8_i32 : i32 to vector<16x24xi32>
    %29 = arith.cmpi slt, %24, %28 : vector<16x24xi32>
    %30 = arith.andi %27, %29 : vector<16x24xi1>
    %c15_i32 = arith.constant 15 : i32
    %31 = vector.broadcast %c15_i32 : i32 to vector<16x24xi32>
    %32 = arith.select %30, %31, %25 : vector<16x24xi1>, vector<16x24xi32>
    %c8_i32_12 = arith.constant 8 : i32
    %33 = vector.broadcast %c8_i32_12 : i32 to vector<16x24xi32>
    %34 = arith.cmpi sge, %24, %33 : vector<16x24xi32>
    %c16_i32 = arith.constant 16 : i32
    %35 = vector.broadcast %c16_i32 : i32 to vector<16x24xi32>
    %36 = arith.cmpi slt, %24, %35 : vector<16x24xi32>
    %37 = arith.andi %34, %36 : vector<16x24xi1>
    %c14_i32 = arith.constant 14 : i32
    %38 = vector.broadcast %c14_i32 : i32 to vector<16x24xi32>
    %39 = arith.select %37, %38, %32 : vector<16x24xi1>, vector<16x24xi32>
    %c16_i32_13 = arith.constant 16 : i32
    %40 = vector.broadcast %c16_i32_13 : i32 to vector<16x24xi32>
    %41 = arith.cmpi sge, %24, %40 : vector<16x24xi32>
    %c24_i32 = arith.constant 24 : i32
    %42 = vector.broadcast %c24_i32 : i32 to vector<16x24xi32>
    %43 = arith.cmpi slt, %24, %42 : vector<16x24xi32>
    %44 = arith.andi %41, %43 : vector<16x24xi1>
    %c13_i32 = arith.constant 13 : i32
    %45 = vector.broadcast %c13_i32 : i32 to vector<16x24xi32>
    %46 = arith.select %44, %45, %39 : vector<16x24xi1>, vector<16x24xi32>
    %47 = arith.cmpi slt, %23, %46 : vector<16x24xi32>
    %cst_14 = arith.constant 0.000000e+00 : f32
    %48 = vector.broadcast %cst_14 : f32 to vector<16x24xf32>
    %49 = arith.select %47, %22, %48 : vector<16x24xi1>, vector<16x24xf32>
    %50 = vector.shape_cast %49 : vector<16x24xf32> to vector<1x16x24xf32>
    %cst_15 = arith.constant dense<0xFF800000> : vector<1x24xf32>
    %51 = vector.multi_reduction <maximumf>, %50, %cst_15 [1] : vector<1x16x24xf32> to vector<1x24xf32>
    %52 = vector.shape_cast %51 : vector<1x24xf32> to vector<1x1x24xf32>
    %c0_16 = arith.constant 0 : index
    %c0_17 = arith.constant 0 : index
    %c0_18 = arith.constant 0 : index
    %53 = vector.load %arg5[%c0_16, %c0_17, %c0_18] : memref<1x1x24xf32, #tpu.memory_space<vmem>>, vector<1x1x24xf32>
    tpu.vector_store %arg5[%c0_16, %c0_17, %c0_18], %52 {strides = array<i32>} : memref<1x1x24xf32, #tpu.memory_space<vmem>>, vector<1x1x24xf32>,
    return
  }
  func.func @transform_0(%arg0: i32) -> (i32, i32, i32) {
    %c0_i32 = arith.constant 0 : i32
    %c0_i32_0 = arith.constant 0 : i32
    %c0_i32_1 = arith.constant 0 : i32
    return %arg0, %c0_i32, %c0_i32_0 : i32, i32, i32
  }
  func.func @transform_1(%arg0: i32) -> (i32, i32) {
    %c0_i32 = arith.constant 0 : i32
    %c0_i32_0 = arith.constant 0 : i32
    %c0_i32_1 = arith.constant 0 : i32
    return %c0_i32, %c0_i32_0 : i32, i32
  }
  func.func @transform_2(%arg0: i32) -> (i32, i32) {
    %c0_i32 = arith.constant 0 : i32
    %c0_i32_0 = arith.constant 0 : i32
    %c0_i32_1 = arith.constant 0 : i32
    return %c0_i32, %c0_i32_0 : i32, i32
  }
  func.func @transform_3(%arg0: i32) -> (i32, i32) {
    %c0_i32 = arith.constant 0 : i32
    %c0_i32_0 = arith.constant 0 : i32
    %c0_i32_1 = arith.constant 0 : i32
    return %c0_i32, %c0_i32_0 : i32, i32
  }
  func.func @transform_4(%arg0: i32) -> (i32, i32, i32) {
    %c0_i32 = arith.constant 0 : i32
    %c0_i32_0 = arith.constant 0 : i32
    %c0_i32_1 = arith.constant 0 : i32
    return %arg0, %c0_i32, %c0_i32_0 : i32, i32, i32
  }
}

</mosaic_0001>

<llo_original>
// kernel: tpu_custom_call.1
$region0: #{tpu_custom_call.1}
  #allocation0 [shape = 'u32[]', space=smem, size = 0x4, offset = 0x4, fixed_abs, tag = 'smem constant byte address 0x4 - core index']
  #allocation1 [shape = 'u32[144,128]{1,0:T(1,128)}', space=vmem, size = 0x12000, scoped, tag = 'internal scratch']
  %s0 = inlined_call_operand.vmem [shape: s32[2,16,1], index: 0, kind: input, shape index: {}]
  %s1 = inlined_call_operand.vmem [shape: f32[56,32], index: 1, kind: input, shape index: {}]
  %s2 = inlined_call_operand.vmem [shape: f32[128,24], index: 2, kind: input, shape index: {}]
  %s3 = inlined_call_operand.vmem [shape: f32[1,24], index: 3, kind: input, shape index: {}]
  %s4 = inlined_call_operand.hbm [shape: f32[2,1,24], index: 4, kind: output, shape index: {}]
  %s5 = sld [smem:[#allocation0]]
  $region49: #{tpu_custom_call.1} parent=0
    _
  %s7 = ssub.s32 1, %s5
  %s8 = scalar_select 0, %s7, %s5
  $region1: #{tpu_custom_call.1} parent=0
    #allocation2 [shape = 'u8[1024]{0}', space=vmem, size = 0x400, scoped, tag = 'output window, operand 0']
    #allocation3 [shape = 's32[2]{0}', space=sflag, size = 0x8, scoped, tag = 'scoped memory for tpu_custom_call.1']
    %9 = vsyncpa [#allocation3], 0
    %s10 = scalar_lea.sflag [#allocation3], 1
    %11 = vsyncpa %s10, 0
    loop: start=0, step=1, limit=4
    $region2: #{tpu_custom_call.1} parent=1 // loop_pre_header
      _
    $region3: #{tpu_custom_call.1} parent=1 // loop_header
      %s13 = sphi 0, %s17
      %p14 = scmp.ge.s32.totalorder %s13, 4
      %s23 = sphi 0, %s25
      %s26 = sphi 0, %s23
      %s27 = sphi 0, %s26
      %s43 = sphi 0, %s27
      %s47 = sphi 0, %s47
      %s49 = sphi 0, %s47
      %s50 = sphi 0, %s49
      %s64 = sphi 0, %s50
      %s68 = sphi 0, %s68
      %s70 = sphi 0, %s68
      %s71 = sphi 0, %s70
      %s85 = sphi 0, %s71
      %s89 = sphi 0, %s89
      %s91 = sphi 0, %s89
      %s92 = sphi 0, %s91
      %s106 = sphi 0, %s92
      %s112 = sphi 0, %s114
      %s115 = sphi 0, %s112
      %s116 = sphi 0, %s115
      %s132 = sphi 0, %s116
    $region4: #{tpu_custom_call.1} parent=1 // loop_header_branch
      %16 = sbr.rel (%p14) target = $region8
    $region5: #{tpu_custom_call.1} parent=1 // loop_body
      %s18 = ssub.s32 %s13, 1
      %s19 = ssub.s32 %s13, 2
      %s20 = sadd.s32 %s13, 1
      %s21 = ssub.s32 %s13, %s20
      %p22 = scmp.eq.s32.totalorder %s21, 0
      %s24 = sadd.s32 %s23, 1
      %s25 = scalar_select %p22, %s23, %s24
      %p28 = pneg %p22
      %p29 = scmp.eq.s32.totalorder %s13, 1
      %p30 = por %p28, %p29
      %p31 = scmp.ne.s32.totalorder %s23, %s26
      %p32 = scmp.eq.s32.totalorder %s13, 0
      %p33 = por %p31, %p32
      %p34 = scmp.ne.s32.totalorder %s23, %s26
      %p35 = scmp.eq.s32.totalorder %s18, 1
      %p36 = por %p34, %p35
      %p37 = scmp.ne.s32.totalorder %s26, %s27
      %p38 = scmp.eq.s32.totalorder %s18, 0
      %p39 = por %p37, %p38
      %p40 = scmp.ne.s32.totalorder %s26, %s27
      %p41 = scmp.eq.s32.totalorder %s19, 1
      %p42 = por %p40, %p41
      %p44 = scmp.ne.s32.totalorder %s27, %s43
      %p45 = scmp.eq.s32.totalorder %s19, 0
      %p46 = por %p44, %p45
      %s48 = sadd.s32 %s47, 1
      %p51 = scmp.eq.s32.totalorder %s13, 1
      %p52 = scmp.ne.s32.totalorder %s47, %s49
      %p53 = scmp.eq.s32.totalorder %s13, 0
      %p54 = por %p52, %p53
      %p55 = scmp.ne.s32.totalorder %s47, %s49
      %p56 = scmp.eq.s32.totalorder %s18, 1
      %p57 = por %p55, %p56
      %p58 = scmp.ne.s32.totalorder %s49, %s50
      %p59 = scmp.eq.s32.totalorder %s18, 0
      %p60 = por %p58, %p59
      %p61 = scmp.ne.s32.totalorder %s49, %s50
      %p62 = scmp.eq.s32.totalorder %s19, 1
      %p63 = por %p61, %p62
      %p65 = scmp.ne.s32.totalorder %s50, %s64
      %p66 = scmp.eq.s32.totalorder %s19, 0
      %p67 = por %p65, %p66
      %s69 = sadd.s32 %s68, 1
      %p72 = scmp.eq.s32.totalorder %s13, 1
      %p73 = scmp.ne.s32.totalorder %s68, %s70
      %p74 = scmp.eq.s32.totalorder %s13, 0
      %p75 = por %p73, %p74
      %p76 = scmp.ne.s32.totalorder %s68, %s70
      %p77 = scmp.eq.s32.totalorder %s18, 1
      %p78 = por %p76, %p77
      %p79 = scmp.ne.s32.totalorder %s70, %s71
      %p80 = scmp.eq.s32.totalorder %s18, 0
      %p81 = por %p79, %p80
      %p82 = scmp.ne.s32.totalorder %s70, %s71
      %p83 = scmp.eq.s32.totalorder %s19, 1
      %p84 = por %p82, %p83
      %p86 = scmp.ne.s32.totalorder %s71, %s85
      %p87 = scmp.eq.s32.totalorder %s19, 0
      %p88 = por %p86, %p87
      %s90 = sadd.s32 %s89, 1
      %p93 = scmp.eq.s32.totalorder %s13, 1
      %p94 = scmp.ne.s32.totalorder %s89, %s91
      %p95 = scmp.eq.s32.totalorder %s13, 0
      %p96 = por %p94, %p95
      %p97 = scmp.ne.s32.totalorder %s89, %s91
      %p98 = scmp.eq.s32.totalorder %s18, 1
      %p99 = por %p97, %p98
      %p100 = scmp.ne.s32.totalorder %s91, %s92
      %p101 = scmp.eq.s32.totalorder %s18, 0
      %p102 = por %p100, %p101
      %p103 = scmp.ne.s32.totalorder %s91, %s92
      %p104 = scmp.eq.s32.totalorder %s19, 1
      %p105 = por %p103, %p104
      %p107 = scmp.ne.s32.totalorder %s92, %s106
      %p108 = scmp.eq.s32.totalorder %s19, 0
      %p109 = por %p107, %p108
      %s110 = ssub.s32 %s13, %s20
      %p111 = scmp.eq.s32.totalorder %s110, 0
      %s113 = sadd.s32 %s112, 1
      %s114 = scalar_select %p111, %s112, %s113
      %p117 = pneg %p111
      %p118 = scmp.eq.s32.totalorder %s13, 1
      %p119 = por %p117, %p118
      %p120 = scmp.ne.s32.totalorder %s112, %s115
      %p121 = scmp.eq.s32.totalorder %s13, 0
      %p122 = por %p120, %p121
      %p123 = scmp.ne.s32.totalorder %s112, %s115
      %p124 = scmp.eq.s32.totalorder %s18, 1
      %p125 = por %p123, %p124
      %p126 = scmp.ne.s32.totalorder %s115, %s116
      %p127 = scmp.eq.s32.totalorder %s18, 0
      %p128 = por %p126, %p127
      %p129 = scmp.ne.s32.totalorder %s115, %s116
      %p130 = scmp.eq.s32.totalorder %s19, 1
      %p131 = por %p129, %p130
      %p133 = scmp.ne.s32.totalorder %s116, %s132
      %p134 = scmp.eq.s32.totalorder %s19, 0
      %p135 = por %p133, %p134
      %p136 = scmp.le.s32.totalorder 1, %s13
      %p137 = scmp.lt.s32.totalorder %s13, 3
      %p138 = pnand %p136, %p137
      %p139 = pneg %p138
      // Predicated region
      $region9: #{tpu_custom_call.1} parent=5 // pred_check
        _
      $region10: #{tpu_custom_call.1} parent=5 // pred_check_branch
        %141 = sbr.rel (%p138) target = $region12
      $region11: #{tpu_custom_call.1} parent=5 // pred_region
        %s142 = ssub.s32 %s13, 1
        // Predicated region
        $region13: #{tpu_custom_call.1} parent=11 // pred_check
          %p143 = pneg %p60
        $region14: #{tpu_custom_call.1} parent=11 // pred_check_branch
          %145 = sbr.rel (%p143) target = $region16
        $region15: #{tpu_custom_call.1} parent=11 // pred_region
          _
        $region16: #{tpu_custom_call.1} parent=11 // pred_fallthru
          _
        // Predicated region
        $region17: #{tpu_custom_call.1} parent=11 // pred_check
          %p146 = pneg %p81
        $region18: #{tpu_custom_call.1} parent=11 // pred_check_branch
          %148 = sbr.rel (%p146) target = $region20
        $region19: #{tpu_custom_call.1} parent=11 // pred_region
          _
        $region20: #{tpu_custom_call.1} parent=11 // pred_fallthru
          _
        // Predicated region
        $region21: #{tpu_custom_call.1} parent=11 // pred_check
          %p149 = pneg %p102
        $region22: #{tpu_custom_call.1} parent=11 // pred_check_branch
          %151 = sbr.rel (%p149) target = $region24
        $region23: #{tpu_custom_call.1} parent=11 // pred_region
          _
        $region24: #{tpu_custom_call.1} parent=11 // pred_fallthru
          _
      $region12: #{tpu_custom_call.1} parent=5 // pred_fallthru
        _
      %p152 = scmp.lt.s32.totalorder %s13, 2
      // Predicated region
      $region25: #{tpu_custom_call.1} parent=5 // pred_check
        %p153 = pneg %p152
      $region26: #{tpu_custom_call.1} parent=5 // pred_check_branch
        %155 = sbr.rel (%p153) target = $region28
      $region27: #{tpu_custom_call.1} parent=5 // pred_region
        // Predicated region
        $region29: #{tpu_custom_call.1} parent=27 // pred_check
          %p156 = pneg %p33
        $region30: #{tpu_custom_call.1} parent=27 // pred_check_branch
          %158 = sbr.rel (%p156) target = $region32
        $region31: #{tpu_custom_call.1} parent=27 // pred_region
          %p159 = scmp.lt.s32.totalorder %s13, 1
          %s160 = scalar_select %p159, %s13, 1
          %s161 = smul.addr %s160, 2
          %s162 = smul.addr %s161, 8
          %s163 = scalar_lea.vmem %s0, %s162
        $region32: #{tpu_custom_call.1} parent=27 // pred_fallthru
          _
      $region28: #{tpu_custom_call.1} parent=5 // pred_fallthru
        _
      %p164 = scmp.le.s32.totalorder 1, %s13
      %p165 = scmp.lt.s32.totalorder %s13, 3
      %p166 = pnand %p164, %p165
      %p167 = pneg %p166
      // Predicated region
      $region33: #{tpu_custom_call.1} parent=5 // pred_check
        _
      $region34: #{tpu_custom_call.1} parent=5 // pred_check_branch
        %169 = sbr.rel (%p166) target = $region36
      $region35: #{tpu_custom_call.1} parent=5 // pred_region
        %s170 = ssub.s32 %s13, 1
        %p171 = scmp.lt.s32.totalorder %s18, 1
        %s172 = scalar_select %p171, %s18, 1
        %s173 = smul.addr %s172, 2
        %s174 = smul.addr %s173, 8
        %s175 = scalar_lea.vmem %s0, %s174
        %p176 = pneg %p39
        %p177 = pneg %p36
        %p178 = pneg %p60
        %p179 = pneg %p57
        %p180 = pneg %p81
        %p181 = pneg %p78
        %p182 = pneg %p102
        %p183 = pneg %p99
        %p184 = pneg %p128
        %p185 = pneg %p125
        %s186 = sand.u32 %s115, 1
        %s187 = scalar_lea.sflag [#allocation3], %s186
        %s188 = sand.u32 %s115, 1
        %s189 = scalar_lea.vmem [#allocation2], %s188
        %p190 = scmp.lt.s32.totalorder %s18, 1
        %s191 = scalar_select %p190, %s18, 1
        %s192 = smul.addr %s191, 2
        %s193 = smul.addr %s192, 8
        %s194 = scalar_lea.vmem %s0, %s193
        %v195 = vld [vmem:[%s194] sm:$0xff]
        %v196 = vld [vmem:[%s194 + $0x8] sm:$0xff]
        %v197 = vlaneseq
        %v198 = vand.u32 %v197, 127
        %199 = vset.pattern.permute.xlu0 0
        %200 = vperm.xlu0 %199, %v195
        %v201 = vpop.permute.xlu0 %200
        %202 = vset.pattern.permute.xlu0 0
        %203 = vperm.xlu0 %202, %v196
        %v204 = vpop.permute.xlu0 %203
        %vm205 = vcmp.eq.s32.totalorder %v198, %v201
        %vm206 = vcmp.eq.s32.totalorder %v198, %v204
        %v207 = vsel %vm205, 1, 0
        %v208 = vsel %vm206, 1, 0
        %v209 = vcvt.s32.f32 %v207
        %v210 = vcvt.s32.f32 %v208
        %v211 = vld [vmem:[%s1] sm:$0xff]
        %v212 = vld [vmem:[%s1 + $0x8] sm:$0xff]
        %v213 = vld [vmem:[%s1 + $0x10] sm:$0xff]
        %v214 = vld [vmem:[%s1 + $0x18] sm:$0xff]
        %v215 = vld [vmem:[%s1 + $0x20] sm:$0xff]
        %v216 = vld [vmem:[%s1 + $0x28] sm:$0xff]
        %v217 = vld [vmem:[%s1 + $0x30] sm:$0xff]
        %vm218 = vcmask 457728
        %v220 = vsel %vm218, %v209, 0
        %v223 = vsel %vm218, %v210, 0
        %225 = vmatprep.subr.mxu0 0.0
        %226 = vmatpush1.msra.mxu0 %v211
        %227 = vmatprep.subr.mxu0 0.0
        %228 = vmatpush1.msra.mxu0 %v212
        %229 = vmatprep.subr.mxu0 0.0
        %230 = vmatpush1.msra.mxu0 %v213
        %231 = vmatprep.subr.mxu0 0.0
        %232 = vmatpush1.msra.mxu0 %v214
        %233 = vmatprep.subr.mxu0 0.0
        %234 = vmatpush1.msra.mxu0 %v215
        %235 = vmatprep.subr.mxu0 0.0
        %236 = vmatpush1.msra.mxu0 %v216
        %237 = vmatprep.subr.mxu0 0.0
        %238 = vmatpush1.msra.mxu0 %v217
        %239 = vmatprep.subr.mxu0 0.0
        %240 = vmatpush1.msra.mxu0 0.0
        %241 = vmatprep.subr.mxu0 0.0
        %242 = vmatpush1.msra.mxu0 0.0
        %243 = vmatprep.subr.mxu0 0.0
        %244 = vmatpush1.msra.mxu0 0.0
        %245 = vmatprep.subr.mxu0 0.0
        %246 = vmatpush1.msra.mxu0 0.0
        %247 = vmatprep.subr.mxu0 0.0
        %248 = vmatpush1.msra.mxu0 0.0
        %249 = vmatprep.subr.mxu0 0.0
        %250 = vmatpush1.msra.mxu0 0.0
        %251 = vmatprep.subr.mxu0 0.0
        %252 = vmatpush1.msra.mxu0 0.0
        %253 = vmatprep.subr.mxu0 0.0
        %254 = vmatpush1.msra.mxu0 0.0
        %255 = vmatprep.subr.mxu0 0.0
        %256 = vmatpush1.msra.mxu0 0.0
        %257 = vmatprep.subr.mxu0 0.0
        %258 = vmatpush1.msra.mxu0 0.0
        %259 = vmatprep.subr.mxu0 0.0
        %260 = vmatpush1.msra.mxu0 0.0
        %261 = vmatprep.subr.mxu0 0.0
        %262 = vmatpush1.msra.mxu0 0.0
        %263 = vmatprep.subr.mxu0 0.0
        %264 = vmatpush1.msra.mxu0 0.0
        %265 = vmatprep.subr.mxu0 0.0
        %266 = vmatpush1.msra.mxu0 0.0
        %267 = vmatprep.subr.mxu0 0.0
        %268 = vmatpush1.msra.mxu0 0.0
        %269 = vmatprep.subr.mxu0 0.0
        %270 = vmatpush1.msra.mxu0 0.0
        %271 = vmatprep.subr.mxu0 0.0
        %272 = vmatpush1.msra.mxu0 0.0
        %273 = vmatprep.subr.mxu0 0.0
        %274 = vmatpush1.msra.mxu0 0.0
        %275 = vmatprep.subr.mxu0 0.0
        %276 = vmatpush1.msra.mxu0 0.0
        %277 = vmatprep.subr.mxu0 0.0
        %278 = vmatpush1.msra.mxu0 0.0
        %279 = vmatprep.subr.mxu0 0.0
        %280 = vmatpush1.msra.mxu0 0.0
        %281 = vmatprep.subr.mxu0 0.0
        %282 = vmatpush1.msra.mxu0 0.0
        %283 = vmatprep.subr.mxu0 0.0
        %284 = vmatpush1.msra.mxu0 0.0
        %285 = vmatprep.subr.mxu0 0.0
        %286 = vmatpush1.msra.mxu0 0.0
        %287 = vmatprep.subr.mxu0 0.0
        %288 = vmatpush1.msra.mxu0 0.0
        %289 = vmatprep.mubr.f32.mxu0 0.0
        %290 = vmatmul.mubr.f32.gmra.mrb[0].mxu0 %v220
        %v291 = vpop.f32.mrb[0].mxu0
        %v292 = vadd.f32 0.0, %v291
        %v293 = vpop.f32.mrb[0].mxu0
        %294 = vmatprep.mubr.f32.mxu0 0.0
        %295 = vmatmul.mubr.f32.gmra.mrb[0].mxu0 %v223
        %v296 = vpop.f32.mrb[0].mxu0
        %v297 = vadd.f32 0.0, %v296
        %v298 = vpop.f32.mrb[0].mxu0
        %299 = vdwg.mxu0
        %vm303 = vcmask 1046528
        %v304 = vrot.slane %v292, 1
        %v305 = vrot.slane %v297, 1
        %v306 = vsel %vm303, %v304, %v305
        %v307 = vrot.slane 0.0, 1
        %v308 = vsel %vm303, %v305, %v307
        %309 = vrot.lane.b32.xlu0 %v306, 32
        %v310 = vpop.permute.xlu0 %309
        %311 = vrot.lane.b32.xlu0 %v308, 32
        %v312 = vpop.permute.xlu0 %311
        %vm315 = vcmask 1045504
        %v316 = vrot.slane %v292, 2
        %v317 = vrot.slane %v297, 2
        %v318 = vsel %vm315, %v316, %v317
        %v319 = vrot.slane 0.0, 2
        %v320 = vsel %vm315, %v317, %v319
        %321 = vrot.lane.b32.xlu0 %v318, 64
        %v322 = vpop.permute.xlu0 %321
        %323 = vrot.lane.b32.xlu0 %v320, 64
        %v324 = vpop.permute.xlu0 %323
        %vm327 = vcmask 1044480
        %v328 = vrot.slane %v292, 3
        %v329 = vrot.slane %v297, 3
        %v330 = vsel %vm327, %v328, %v329
        %v331 = vrot.slane 0.0, 3
        %v332 = vsel %vm327, %v329, %v331
        %333 = vrot.lane.b32.xlu0 %v330, 96
        %v334 = vpop.permute.xlu0 %333
        %335 = vrot.lane.b32.xlu0 %v332, 96
        %v336 = vpop.permute.xlu0 %335
        %vm339 = vcmask 261120
        %v340 = vsel %vm339, %v292, %v310
        %v341 = vsel %vm339, %v297, %v312
        %vm342 = vcmask 523264
        %v343 = vsel %vm342, %v340, %v322
        %v344 = vsel %vm342, %v341, %v324
        %vm345 = vcmask 785408
        %v346 = vsel %vm345, %v343, %v334
        %v347 = vsel %vm345, %v344, %v336
        %v348 = vld [vmem:[%s2] sm:$0xff]
        %v349 = vld [vmem:[%s2 + $0x8] sm:$0xff]
        %v350 = vld [vmem:[%s2 + $0x10] sm:$0xff]
        %v351 = vld [vmem:[%s2 + $0x18] sm:$0xff]
        %v352 = vld [vmem:[%s2 + $0x20] sm:$0xff]
        %v353 = vld [vmem:[%s2 + $0x28] sm:$0xff]
        %v354 = vld [vmem:[%s2 + $0x30] sm:$0xff]
        %v355 = vld [vmem:[%s2 + $0x38] sm:$0xff]
        %v356 = vld [vmem:[%s2 + $0x40] sm:$0xff]
        %v357 = vld [vmem:[%s2 + $0x48] sm:$0xff]
        %v358 = vld [vmem:[%s2 + $0x50] sm:$0xff]
        %v359 = vld [vmem:[%s2 + $0x58] sm:$0xff]
        %v360 = vld [vmem:[%s2 + $0x60] sm:$0xff]
        %v361 = vld [vmem:[%s2 + $0x68] sm:$0xff]
        %v362 = vld [vmem:[%s2 + $0x70] sm:$0xff]
        %v363 = vld [vmem:[%s2 + $0x78] sm:$0xff]
        %v364 = vld [vmem:[%s3] sm:$0x1]
        %v366 = vlaneseq
        %v367 = vshrl.u32 %v366, 7
        %v368 = vsub.s32 0, %v367
        %v369 = vrot.slane %v364, %v368
        %371 = vmatprep.subr.mxu0 0.0
        %372 = vmatpush1.msra.mxu0 %v348
        %373 = vmatprep.subr.mxu0 0.0
        %374 = vmatpush1.msra.mxu0 %v349
        %375 = vmatprep.subr.mxu0 0.0
        %376 = vmatpush1.msra.mxu0 %v350
        %377 = vmatprep.subr.mxu0 0.0
        %378 = vmatpush1.msra.mxu0 %v351
        %379 = vmatprep.subr.mxu0 0.0
        %380 = vmatpush1.msra.mxu0 %v352
        %381 = vmatprep.subr.mxu0 0.0
        %382 = vmatpush1.msra.mxu0 %v353
        %383 = vmatprep.subr.mxu0 0.0
        %384 = vmatpush1.msra.mxu0 %v354
        %385 = vmatprep.subr.mxu0 0.0
        %386 = vmatpush1.msra.mxu0 %v355
        %387 = vmatprep.subr.mxu0 0.0
        %388 = vmatpush1.msra.mxu0 %v356
        %389 = vmatprep.subr.mxu0 0.0
        %390 = vmatpush1.msra.mxu0 %v357
        %391 = vmatprep.subr.mxu0 0.0
        %392 = vmatpush1.msra.mxu0 %v358
        %393 = vmatprep.subr.mxu0 0.0
        %394 = vmatpush1.msra.mxu0 %v359
        %395 = vmatprep.subr.mxu0 0.0
        %396 = vmatpush1.msra.mxu0 %v360
        %397 = vmatprep.subr.mxu0 0.0
        %398 = vmatpush1.msra.mxu0 %v361
        %399 = vmatprep.subr.mxu0 0.0
        %400 = vmatpush1.msra.mxu0 %v362
        %401 = vmatprep.subr.mxu0 0.0
        %402 = vmatpush1.msra.mxu0 %v363
        %403 = vmatprep.subr.mxu0 0.0
        %404 = vmatpush1.msra.mxu0 0.0
        %405 = vmatprep.subr.mxu0 0.0
        %406 = vmatpush1.msra.mxu0 0.0
        %407 = vmatprep.subr.mxu0 0.0
        %408 = vmatpush1.msra.mxu0 0.0
        %409 = vmatprep.subr.mxu0 0.0
        %410 = vmatpush1.msra.mxu0 0.0
        %411 = vmatprep.subr.mxu0 0.0
        %412 = vmatpush1.msra.mxu0 0.0
        %413 = vmatprep.subr.mxu0 0.0
        %414 = vmatpush1.msra.mxu0 0.0
        %415 = vmatprep.subr.mxu0 0.0
        %416 = vmatpush1.msra.mxu0 0.0
        %417 = vmatprep.subr.mxu0 0.0
        %418 = vmatpush1.msra.mxu0 0.0
        %419 = vmatprep.subr.mxu0 0.0
        %420 = vmatpush1.msra.mxu0 0.0
        %421 = vmatprep.subr.mxu0 0.0
        %422 = vmatpush1.msra.mxu0 0.0
        %423 = vmatprep.subr.mxu0 0.0
        %424 = vmatpush1.msra.mxu0 0.0
        %425 = vmatprep.subr.mxu0 0.0
        %426 = vmatpush1.msra.mxu0 0.0
        %427 = vmatprep.subr.mxu0 0.0
        %428 = vmatpush1.msra.mxu0 0.0
        %429 = vmatprep.subr.mxu0 0.0
        %430 = vmatpush1.msra.mxu0 0.0
        %431 = vmatprep.subr.mxu0 0.0
        %432 = vmatpush1.msra.mxu0 0.0
        %433 = vmatprep.subr.mxu0 0.0
        %434 = vmatpush1.msra.mxu0 0.0
        %435 = vmatprep.mubr.f32.mxu0 0.0
        %436 = vmatmul.mubr.f32.gmra.mrb[0].mxu0 %v346
        %v437 = vpop.f32.mrb[0].mxu0
        %v438 = vadd.f32 %v369, %v437
        %v439 = vpop.f32.mrb[0].mxu0
        %440 = vmatprep.mubr.f32.mxu0 0.0
        %441 = vmatmul.mubr.f32.gmra.mrb[0].mxu0 %v347
        %v442 = vpop.f32.mrb[0].mxu0
        %v443 = vadd.f32 %v369, %v442
        %v444 = vpop.f32.mrb[0].mxu0
        %445 = vdwg.mxu0
        %v446 = vmax.f32 %v438, 0.0
        %v447 = vmax.f32 %v443, 0.0
        %v448 = vlaneseq
        %v449 = vshrl.u32 %v448, 7
        %v450 = vadd.s32 %v449, 8
        %vm451 = vcmp.ge.s32.totalorder %v198, 0
        %vm452 = vcmp.lt.s32.totalorder %v198, 8
        %vm453 = vmand %vm451, %vm452
        %v454 = vsel %vm453, 15, 0
        %vm455 = vcmp.ge.s32.totalorder %v198, 8
        %vm456 = vcmp.lt.s32.totalorder %v198, 16
        %vm457 = vmand %vm455, %vm456
        %v458 = vsel %vm457, 14, %v454
        %vm459 = vcmp.ge.s32.totalorder %v198, 16
        %vm460 = vcmp.lt.s32.totalorder %v198, 24
        %vm461 = vmand %vm459, %vm460
        %v462 = vsel %vm461, 13, %v458
        %vm463 = vcmp.lt.s32.totalorder %v449, %v462
        %vm464 = vcmp.lt.s32.totalorder %v450, %v462
        %v465 = vsel %vm463, %v446, 0.0
        %v466 = vsel %vm464, %v447, 0.0
        %vm467 = vcmask 195584
        %v468 = vsel %vm467, %v465, -inf
        %v469 = vsel %vm467, %v466, -inf
        %v470 = vmax.f32 %v468, %v469
        %v471 = vrot.slane %v470, 4
        %v472 = vmax.f32 %v470, %v471
        %v473 = vrot.slane %v472, 2
        %v474 = vmax.f32 %v472, %v473
        %v475 = vrot.slane %v474, 1
        %v476 = vmax.f32 %v474, %v475
        %vm477 = vcmask 188416
        %478 = vst.msk [vmem:[%s189] sm:$0x1] %vm477, %v476
        %s479 = sand.u32 %s115, 1
        %s480 = scalar_lea.sflag [#allocation3], %s479
        %s481 = sand.u32 %s115, 1
        %s482 = scalar_lea.vmem [#allocation2], %s481
        // Predicated region
        $region37: #{tpu_custom_call.1} parent=35 // pred_check
          %p483 = pneg %p125
        $region38: #{tpu_custom_call.1} parent=35 // pred_check_branch
          %485 = sbr.rel (%p483) target = $region40
        $region39: #{tpu_custom_call.1} parent=35 // pred_region
          %s487 = ssub.s32 16, 16
          %488 = vsyncadd %s480, %s487
          %s489 = smul.addr %s18, 16
          %s490 = scalar_lea.hbm %s4, %s489
          %s492 = sshll.u32 %s482, 4
          %s493 = int_to_ptr.vmem [resolvable:$true] %s492
          %495 = dma.vmem_to_hbm [thread:$0]  %s493, 16, %s490, %s480
        $region40: #{tpu_custom_call.1} parent=35 // pred_fallthru
          _
      $region36: #{tpu_custom_call.1} parent=5 // pred_fallthru
        _
      %p496 = scmp.le.s32.totalorder 2, %s13
      // Predicated region
      $region41: #{tpu_custom_call.1} parent=5 // pred_check
        %p497 = pneg %p496
      $region42: #{tpu_custom_call.1} parent=5 // pred_check_branch
        %499 = sbr.rel (%p497) target = $region44
      $region43: #{tpu_custom_call.1} parent=5 // pred_region
        %s500 = ssub.s32 %s13, 2
        // Predicated region
        $region45: #{tpu_custom_call.1} parent=43 // pred_check
          %p501 = pneg %p131
        $region46: #{tpu_custom_call.1} parent=43 // pred_check_branch
          %503 = sbr.rel (%p501) target = $region48
        $region47: #{tpu_custom_call.1} parent=43 // pred_region
          %s504 = sand.u32 %s116, 1
          %s505 = scalar_lea.sflag [#allocation3], %s504
          %s506 = sand.u32 %s116, 1
          %s507 = scalar_lea.vmem [#allocation2], %s506
          %508 = dma.done %s505, 16
        $region48: #{tpu_custom_call.1} parent=43 // pred_fallthru
          _
      $region44: #{tpu_custom_call.1} parent=5 // pred_fallthru
        _
    $region6: #{tpu_custom_call.1} parent=1 // loop_footer
      %s17 = sadd.s32 1, %s13
    $region7: #{tpu_custom_call.1} parent=1 // loop_footer_branch
      %12 = sbr.rel target = $region3
    $region8: #{tpu_custom_call.1} parent=1 // loop_exit
      _
    %509 = vsyncpa [#allocation3], 1
    %s510 = scalar_lea.sflag [#allocation3], 1
    %511 = vsyncpa %s510, 1

</llo_original>
